<compile_context>
chip_gen: v7x
topology: tpu7x:2x2x1
jax: 0.10.0
libtpu: 0.0.40
codegen_flags: <defaults>
</compile_context>

<pallas_src>
import jax
import jax.numpy as jnp
from jax.experimental import pallas as pl
from jax.experimental.pallas import tpu as pltpu


def _decoder_kernel(x_ref, wlin_ref, blin_ref, idx_ref, wd_ref, bdec_ref, o_ref):
    # x_ref:    (tb, F)        batch tile of latent factors
    # wlin_ref: (F, J)         linear weight replicated conv_length times (J = KH*C)
    # blin_ref: (1, J)         linear bias, replicated
    # idx_ref:  (tb, J)        unpool indices extended with the kh offsets
    # wd_ref:   (J, KW)        deconv weight, rows ordered kh*C + c
    # bdec_ref: (1, 1)         deconv bias scalar (SMEM)
    # o_ref:    (tb*R, KW)     flat output tile (row t*R + oh)
    tb, J = idx_ref.shape
    TR, KW = o_ref.shape
    R = TR // tb

    # Linear layer (already replicated along lanes) + ReLU  -> (tb, J)
    fc_ext = jnp.dot(x_ref[...], wlin_ref[...],
                     preferred_element_type=jnp.float32) + blin_ref[...]
    r_ext = jnp.maximum(fc_ext, 0.0)

    bias = bdec_ref[0, 0]                                        # scalar from SMEM

    # Scatter-as-mask: LHS[t, oh, kh*C + c] = relu(fc[t, c]) iff oh == idx[t, c] + kh
    row = jax.lax.broadcasted_iota(jnp.int32, (tb, R, J), 1)     # (tb, R, J)
    lhs = jnp.where(row == idx_ref[...][:, None, :],
                    r_ext[:, None, :], 0.0)                      # (tb, R, J)

    # MaxUnpool + ReLU + ConvTranspose2d as ONE MXU matmul for the whole tile.
    lhs2 = lhs.reshape(TR, J)                                    # merge leading dims
    out = jnp.dot(lhs2, wd_ref[...],
                  preferred_element_type=jnp.float32) + bias     # (tb*R, KW)

    o_ref[...] = out.astype(o_ref.dtype)                         # single block store


def decoder_forward(x, lin_w, lin_b, indices, dec_w, dec_b, *,
                    conv_length, review_length, tb=8):
    """x: (B, F); lin_w: (C, F); lin_b: (C,); indices: (B, C, 1, 1) ints in [0, L);
    dec_w: (C, 1, KH, KW); dec_b: (1,).  Returns (B, 1, review_length, KW) f32."""
    B, F = x.shape
    C = lin_w.shape[0]
    KH = conv_length
    KW = dec_w.shape[-1]
    R = review_length
    J = KH * C

    idx = indices.reshape(B, C).astype(jnp.int32)

    # ---- grid-invariant preprocessing (done once, not per grid step) ----
    wlin_ext = jnp.tile(lin_w.T.astype(jnp.float32), (1, KH))                       # (F, J)
    blin_ext = jnp.tile(lin_b.reshape(1, C).astype(jnp.float32), (1, KH))           # (1, J)
    wd2 = jnp.transpose(dec_w[:, 0].astype(jnp.float32), (1, 0, 2)).reshape(J, KW)  # (J, KW)
    khoff = jnp.repeat(jnp.arange(KH, dtype=jnp.int32), C).reshape(1, J)            # (1, J)
    idx_ext = jnp.tile(idx, (1, KH)) + khoff                                        # (B, J)
    bdec = dec_b.reshape(1, 1).astype(jnp.float32)                                  # SMEM scalar

    # ---- batch tiling: tb-row tiles (multiple of 8 for sublane alignment) ----
    tb = max(8, (tb // 8) * 8)
    B_pad = pl.cdiv(B, tb) * tb
    if B_pad != B:
        x = jnp.pad(x, ((0, B_pad - B), (0, 0)))
        idx_ext = jnp.pad(idx_ext, ((0, B_pad - B), (0, 0)))

    out_flat = pl.pallas_call(
        _decoder_kernel,
        out_shape=jax.ShapeDtypeStruct((B_pad * R, KW), jnp.float32),
        grid_spec=pltpu.PrefetchScalarGridSpec(
            num_scalar_prefetch=0,
            grid=(B_pad // tb,),
            in_specs=[
                pl.BlockSpec((tb, F), lambda i: (i, 0)),             # x tile
                pl.BlockSpec((F, J), lambda i: (0, 0)),              # fused linear weight (resident)
                pl.BlockSpec((1, J), lambda i: (0, 0)),              # linear bias (replicated)
                pl.BlockSpec((tb, J), lambda i: (i, 0)),             # extended unpool indices
                pl.BlockSpec((J, KW), lambda i: (0, 0)),             # fused deconv weight (resident)
                pl.BlockSpec(memory_space=pltpu.MemorySpace.SMEM),   # deconv bias scalar
            ],
            out_specs=pl.BlockSpec((tb * R, KW), lambda i: (i, 0)),  # flat output tile
        ),
        compiler_params=pltpu.CompilerParams(
            dimension_semantics=("parallel",),
            vmem_limit_bytes=32 * 1024 * 1024,
        ),
    )(x.astype(jnp.float32), wlin_ext, blin_ext, idx_ext, wd2, bdec)

    out = out_flat.reshape(B_pad, R, KW)[:B]
    return out[:, None, :, :]   # (B, 1, R, KW) to match the PyTorch output layout


def decoder_ref(x, lin_w, lin_b, indices, dec_w, dec_b, *, conv_length, review_length):
    """Pure-JAX reference for Decoder.forward."""
    B, _ = x.shape
    C = lin_w.shape[0]
    KH = conv_length
    KW = dec_w.shape[-1]
    R = review_length
    L = R - KH + 1
    idx = indices.reshape(B, C)

    fc = x @ lin_w.T + lin_b                                   # (B, C)
    u = jnp.zeros((B, C, L), jnp.float32)
    bi = jnp.arange(B)[:, None]
    ci = jnp.arange(C)[None, :]
    u = u.at[bi, ci, idx].set(fc)                              # MaxUnpool2d (width == 1)
    r = jnp.maximum(u, 0.0)                                    # ReLU
    out = jnp.full((B, R, KW), dec_b[0], jnp.float32)
    for kh in range(KH):                                       # ConvTranspose2d
        out = out.at[:, kh:kh + L, :].add(
            jnp.einsum('bcl,cw->blw', r, dec_w[:, 0, kh, :]))
    return out[:, None, :, :]


if __name__ == "__main__":
    batch = 16
    conv_kernel_num = 8      # C
    conv_length = 3          # KH
    word_vec_dim = 32        # KW
    review_length = 16       # R
    latent_factor_num = 16   # F
    L = review_length - conv_length + 1

    key = jax.random.PRNGKey(0)
    kx, kw, kb, ki, kdw, kdb = jax.random.split(key, 6)

    x = jax.random.normal(kx, (batch, latent_factor_num), dtype=jnp.float32)

    # nn.Linear(latent_factor_num, conv_kernel_num)
    bound = 1.0 / (latent_factor_num ** 0.5)
    lin_w = jax.random.uniform(kw, (conv_kernel_num, latent_factor_num),
                               dtype=jnp.float32, minval=-bound, maxval=bound)
    lin_b = jax.random.uniform(kb, (conv_kernel_num,), dtype=jnp.float32,
                               minval=-bound, maxval=bound)

    # MaxUnpool2d indices (from the encoder's MaxPool2d): values in [0, L)
    indices = jax.random.randint(ki, (batch, conv_kernel_num, 1, 1), 0, L,
                                 dtype=jnp.int32)

    # nn.ConvTranspose2d(conv_kernel_num, 1, (conv_length, word_vec_dim))
    dbound = 1.0 / ((conv_kernel_num * conv_length * word_vec_dim) ** 0.5)
    dec_w = jax.random.uniform(kdw, (conv_kernel_num, 1, conv_length, word_vec_dim),
                               dtype=jnp.float32, minval=-dbound, maxval=dbound)
    dec_b = jax.random.uniform(kdb, (1,), dtype=jnp.float32,
                               minval=-dbound, maxval=dbound)

    out = decoder_forward(x, lin_w, lin_b, indices, dec_w, dec_b,
                          conv_length=conv_length, review_length=review_length)
    out = jax.block_until_ready(out)

    ref = decoder_ref(x, lin_w, lin_b, indices, dec_w, dec_b,
                      conv_length=conv_length, review_length=review_length)
    assert out.shape == (batch, 1, review_length, word_vec_dim), out.shape
    assert jnp.allclose(out, ref, atol=1e-4, rtol=1e-4), (out, ref)

    print("KERNEL_OK")
</pallas_src>

<mosaic_0001>
module attributes {stable_mosaic.version = 11 : i64} {
  func.func @_decoder_kernel(%arg0: i32, %arg1: memref<8x16xf32, #tpu.memory_space<vmem>>, %arg2: memref<16x24xf32, #tpu.memory_space<vmem>>, %arg3: memref<1x24xf32, #tpu.memory_space<vmem>>, %arg4: memref<8x24xi32, #tpu.memory_space<vmem>>, %arg5: memref<24x32xf32, #tpu.memory_space<vmem>>, %arg6: memref<1x1xf32, #tpu.memory_space<smem>>, %arg7: memref<128x32xf32, #tpu.memory_space<vmem>>) attributes {dimension_semantics = [#tpu.dimension_semantics<parallel>], iteration_bounds = array<i64: 2>, scalar_prefetch = 0 : i64, scratch_operands = 0 : i64, tpu.core_type = #tpu.core_type<tc>, window_params = [{transform_indices = @transform_0, window_bounds = array<i64: 8, 16>}, {pipeline_mode = #tpu.pipeline_mode<synchronous>, transform_indices = @transform_1, window_bounds = array<i64: 16, 24>}, {pipeline_mode = #tpu.pipeline_mode<synchronous>, transform_indices = @transform_2, window_bounds = array<i64: 1, 24>}, {transform_indices = @transform_3, window_bounds = array<i64: 8, 24>}, {pipeline_mode = #tpu.pipeline_mode<synchronous>, transform_indices = @transform_4, window_bounds = array<i64: 24, 32>}, {transform_indices = @transform_5, window_bounds = array<i64: 1, 1>}, {transform_indices = @transform_6, window_bounds = array<i64: 128, 32>}]} {
    %c0 = arith.constant 0 : index
    %c0_0 = arith.constant 0 : index
    %0 = vector.load %arg1[%c0, %c0_0] : memref<8x16xf32, #tpu.memory_space<vmem>>, vector<8x16xf32>
    %c0_1 = arith.constant 0 : index
    %c0_2 = arith.constant 0 : index
    %1 = vector.load %arg2[%c0_1, %c0_2] : memref<16x24xf32, #tpu.memory_space<vmem>>, vector<16x24xf32>
    %cst = arith.constant dense<0.000000e+00> : vector<8x24xf32>
    %2 = tpu.matmul %0, %1, %cst {dimension_numbers = #tpu.dot_dimension_numbers<[1], [0], [0], [1], [0, 0, 1, 1], [], []>} : vector<8x16xf32>, vector<16x24xf32>, vector<8x24xf32> -> vector<8x24xf32>
    %c0_3 = arith.constant 0 : index
    %c0_4 = arith.constant 0 : index
    %3 = vector.load %arg3[%c0_3, %c0_4] : memref<1x24xf32, #tpu.memory_space<vmem>>, vector<1x24xf32>
    %4 = vector.broadcast %3 : vector<1x24xf32> to vector<8x24xf32>
    %5 = arith.addf %2, %4 : vector<8x24xf32>
    %cst_5 = arith.constant 0.000000e+00 : f32
    %6 = vector.broadcast %cst_5 : f32 to vector<8x24xf32>
    %7 = arith.maximumf %5, %6 : vector<8x24xf32>
    %c0_6 = arith.constant 0 : index
    %c0_7 = arith.constant 0 : index
    %8 = memref.load %arg6[%c0_6, %c0_7] : memref<1x1xf32, #tpu.memory_space<smem>>
    %9 = tpu.iota {dimensions = array<i32: 1>} : vector<8x16x24xi32>
    %c0_8 = arith.constant 0 : index
    %c0_9 = arith.constant 0 : index
    %10 = vector.load %arg4[%c0_8, %c0_9] : memref<8x24xi32, #tpu.memory_space<vmem>>, vector<8x24xi32>
    %11 = vector.shape_cast %10 : vector<8x24xi32> to vector<8x1x24xi32>
    %12 = vector.broadcast %11 : vector<8x1x24xi32> to vector<8x16x24xi32>
    %13 = arith.cmpi eq, %9, %12 : vector<8x16x24xi32>
    %14 = vector.shape_cast %7 : vector<8x24xf32> to vector<8x1x24xf32>
    %cst_10 = arith.constant 0.000000e+00 : f32
    %15 = vector.shape_cast %14 : vector<8x1x24xf32> to vector<8x1x24xf32>
    %16 = vector.broadcast %15 : vector<8x1x24xf32> to vector<8x16x24xf32>
    %17 = vector.broadcast %cst_10 : f32 to vector<8x16x24xf32>
    %18 = arith.select %13, %16, %17 : vector<8x16x24xi1>, vector<8x16x24xf32>
    %19 = vector.shape_cast %18 : vector<8x16x24xf32> to vector<128x24xf32>
    %c0_11 = arith.constant 0 : index
    %c0_12 = arith.constant 0 : index
    %20 = vector.load %arg5[%c0_11, %c0_12] : memref<24x32xf32, #tpu.memory_space<vmem>>, vector<24x32xf32>
    %cst_13 = arith.constant dense<0.000000e+00> : vector<128x32xf32>
    %21 = tpu.matmul %19, %20, %cst_13 {dimension_numbers = #tpu.dot_dimension_numbers<[1], [0], [0], [1], [0, 0, 1, 1], [], []>} : vector<128x24xf32>, vector<24x32xf32>, vector<128x32xf32> -> vector<128x32xf32>
    %22 = vector.broadcast %8 : f32 to vector<128x32xf32>
    %23 = arith.addf %21, %22 : vector<128x32xf32>
    %c0_14 = arith.constant 0 : index
    %c0_15 = arith.constant 0 : index
    %24 = vector.load %arg7[%c0_14, %c0_15] : memref<128x32xf32, #tpu.memory_space<vmem>>, vector<128x32xf32>
    tpu.vector_store %arg7[%c0_14, %c0_15], %23 {strides = array<i32>} : memref<128x32xf32, #tpu.memory_space<vmem>>, vector<128x32xf32>,
    return
  }
  func.func @transform_0(%arg0: i32) -> (i32, i32) {
    %c0_i32 = arith.constant 0 : i32
    %c0_i32_0 = arith.constant 0 : i32
    return %arg0, %c0_i32 : i32, i32
  }
  func.func @transform_1(%arg0: i32) -> (i32, i32) {
    %c0_i32 = arith.constant 0 : i32
    %c0_i32_0 = arith.constant 0 : i32
    %c0_i32_1 = arith.constant 0 : i32
    return %c0_i32, %c0_i32_0 : i32, i32
  }
  func.func @transform_2(%arg0: i32) -> (i32, i32) {
    %c0_i32 = arith.constant 0 : i32
    %c0_i32_0 = arith.constant 0 : i32
    %c0_i32_1 = arith.constant 0 : i32
    return %c0_i32, %c0_i32_0 : i32, i32
  }
  func.func @transform_3(%arg0: i32) -> (i32, i32) {
    %c0_i32 = arith.constant 0 : i32
    %c0_i32_0 = arith.constant 0 : i32
    return %arg0, %c0_i32 : i32, i32
  }
  func.func @transform_4(%arg0: i32) -> (i32, i32) {
    %c0_i32 = arith.constant 0 : i32
    %c0_i32_0 = arith.constant 0 : i32
    %c0_i32_1 = arith.constant 0 : i32
    return %c0_i32, %c0_i32_0 : i32, i32
  }
  func.func @transform_5(%arg0: i32) -> (i32, i32) {
    %c0_i32 = arith.constant 0 : i32
    %c0_i32_0 = arith.constant 0 : i32
    %c0_i32_1 = arith.constant 0 : i32
    return %c0_i32, %c0_i32_0 : i32, i32
  }
  func.func @transform_6(%arg0: i32) -> (i32, i32) {
    %c0_i32 = arith.constant 0 : i32
    %c0_i32_0 = arith.constant 0 : i32
    return %arg0, %c0_i32 : i32, i32
  }
}

</mosaic_0001>

<llo_original>
// kernel: tpu_custom_call.1
$region0: #{tpu_custom_call.1}
  #allocation0 [shape = 'u32[]', space=smem, size = 0x4, offset = 0x4, fixed_abs, tag = 'smem constant byte address 0x4 - core index']
  #allocation1 [shape = 'u32[144,128]{1,0:T(1,128)}', space=vmem, size = 0x12000, scoped, tag = 'internal scratch']
  #allocation2 [shape = 'f32[1,1]{1,0:T(1,128)S(6)}', space=smem, size = 0x200, scoped, tag = 'scoped memory for tpu_custom_call.1']
  %s0 = inlined_call_operand.hbm [shape: f32[16,16], index: 0, kind: input, shape index: {}]
  %s1 = inlined_call_operand.hbm [shape: f32[16,24], index: 1, kind: input, shape index: {}]
  %s2 = inlined_call_operand.vmem [shape: f32[1,24], index: 2, kind: input, shape index: {}]
  %s3 = inlined_call_operand.hbm [shape: s32[16,24], index: 3, kind: input, shape index: {}]
  %s4 = inlined_call_operand.hbm [shape: f32[24,32], index: 4, kind: input, shape index: {}]
  %s5 = inlined_call_operand.<no memory space> [shape: f32[1,1], index: 5, kind: input, shape index: {}]
  %s6 = inlined_call_operand.vmem [shape: f32[256,32], index: 6, kind: output, shape index: {}]
  %s7 = sld [smem:[#allocation0]]
  $region73: #{tpu_custom_call.1} parent=0
    _
  %s9 = ssub.s32 1, %s7
  %s10 = scalar_select 0, %s9, %s7
  %11 = sst [smem:[#allocation2]] %s5
  $region1: #{tpu_custom_call.1} parent=0
    #allocation3 [shape = 'u8[8192]{0}', space=vmem, size = 0x2000, scoped, tag = 'input window, operand 0']
    #allocation4 [shape = 's32[2]{0}', space=sflag, size = 0x8, scoped, tag = 'scoped memory for tpu_custom_call.1']
    #allocation5 [shape = 'u8[8192]{0}', space=vmem, size = 0x2000, scoped, tag = 'input window, operand 1, single buffered']
    #allocation6 [shape = 's32[1]{0}', space=sflag, size = 0x4, scoped, tag = 'scoped memory for tpu_custom_call.1']
    #allocation7 [shape = 'u8[8192]{0}', space=vmem, size = 0x2000, scoped, tag = 'input window, operand 3']
    #allocation8 [shape = 'u8[12288]{0}', space=vmem, size = 0x3000, scoped, tag = 'input window, operand 4, single buffered']
    %12 = vsyncpa [#allocation4], 0
    %s13 = scalar_lea.sflag [#allocation4], 1
    %14 = vsyncpa %s13, 0
    %15 = vsyncpa [#allocation6], 0
    loop: start=0, step=1, limit=4
    $region2: #{tpu_custom_call.1} parent=1 // loop_pre_header
      _
    $region3: #{tpu_custom_call.1} parent=1 // loop_header
      %s17 = sphi 0, %s21
      %p18 = scmp.ge.s32.totalorder %s17, 4
      %s27 = sphi 0, %s29
      %s30 = sphi 0, %s27
      %s31 = sphi 0, %s30
      %s47 = sphi 0, %s31
      %s51 = sphi 0, %s51
      %s53 = sphi 0, %s51
      %s54 = sphi 0, %s53
      %s68 = sphi 0, %s54
      %s72 = sphi 0, %s72
      %s74 = sphi 0, %s72
      %s75 = sphi 0, %s74
      %s89 = sphi 0, %s75
      %s95 = sphi 0, %s97
      %s98 = sphi 0, %s95
      %s99 = sphi 0, %s98
      %s115 = sphi 0, %s99
      %s119 = sphi 0, %s119
      %s121 = sphi 0, %s119
      %s122 = sphi 0, %s121
      %s136 = sphi 0, %s122
      %s140 = sphi 0, %s140
      %s142 = sphi 0, %s140
      %s143 = sphi 0, %s142
      %s157 = sphi 0, %s143
      %s163 = sphi 0, %s165
      %s166 = sphi 0, %s163
      %s167 = sphi 0, %s166
      %s183 = sphi 0, %s167
    $region4: #{tpu_custom_call.1} parent=1 // loop_header_branch
      %20 = sbr.rel (%p18) target = $region8
    $region5: #{tpu_custom_call.1} parent=1 // loop_body
      %s22 = ssub.s32 %s17, 1
      %s23 = ssub.s32 %s17, 2
      %s24 = sadd.s32 %s17, 1
      %s25 = ssub.s32 %s17, %s24
      %p26 = scmp.eq.s32.totalorder %s25, 0
      %s28 = sadd.s32 %s27, 1
      %s29 = scalar_select %p26, %s27, %s28
      %p32 = pneg %p26
      %p33 = scmp.eq.s32.totalorder %s17, 1
      %p34 = por %p32, %p33
      %p35 = scmp.ne.s32.totalorder %s27, %s30
      %p36 = scmp.eq.s32.totalorder %s17, 0
      %p37 = por %p35, %p36
      %p38 = scmp.ne.s32.totalorder %s27, %s30
      %p39 = scmp.eq.s32.totalorder %s22, 1
      %p40 = por %p38, %p39
      %p41 = scmp.ne.s32.totalorder %s30, %s31
      %p42 = scmp.eq.s32.totalorder %s22, 0
      %p43 = por %p41, %p42
      %p44 = scmp.ne.s32.totalorder %s30, %s31
      %p45 = scmp.eq.s32.totalorder %s23, 1
      %p46 = por %p44, %p45
      %p48 = scmp.ne.s32.totalorder %s31, %s47
      %p49 = scmp.eq.s32.totalorder %s23, 0
      %p50 = por %p48, %p49
      %s52 = sadd.s32 %s51, 1
      %p55 = scmp.eq.s32.totalorder %s17, 1
      %p56 = scmp.ne.s32.totalorder %s51, %s53
      %p57 = scmp.eq.s32.totalorder %s17, 0
      %p58 = por %p56, %p57
      %p59 = scmp.ne.s32.totalorder %s51, %s53
      %p60 = scmp.eq.s32.totalorder %s22, 1
      %p61 = por %p59, %p60
      %p62 = scmp.ne.s32.totalorder %s53, %s54
      %p63 = scmp.eq.s32.totalorder %s22, 0
      %p64 = por %p62, %p63
      %p65 = scmp.ne.s32.totalorder %s53, %s54
      %p66 = scmp.eq.s32.totalorder %s23, 1
      %p67 = por %p65, %p66
      %p69 = scmp.ne.s32.totalorder %s54, %s68
      %p70 = scmp.eq.s32.totalorder %s23, 0
      %p71 = por %p69, %p70
      %s73 = sadd.s32 %s72, 1
      %p76 = scmp.eq.s32.totalorder %s17, 1
      %p77 = scmp.ne.s32.totalorder %s72, %s74
      %p78 = scmp.eq.s32.totalorder %s17, 0
      %p79 = por %p77, %p78
      %p80 = scmp.ne.s32.totalorder %s72, %s74
      %p81 = scmp.eq.s32.totalorder %s22, 1
      %p82 = por %p80, %p81
      %p83 = scmp.ne.s32.totalorder %s74, %s75
      %p84 = scmp.eq.s32.totalorder %s22, 0
      %p85 = por %p83, %p84
      %p86 = scmp.ne.s32.totalorder %s74, %s75
      %p87 = scmp.eq.s32.totalorder %s23, 1
      %p88 = por %p86, %p87
      %p90 = scmp.ne.s32.totalorder %s75, %s89
      %p91 = scmp.eq.s32.totalorder %s23, 0
      %p92 = por %p90, %p91
      %s93 = ssub.s32 %s17, %s24
      %p94 = scmp.eq.s32.totalorder %s93, 0
      %s96 = sadd.s32 %s95, 1
      %s97 = scalar_select %p94, %s95, %s96
      %p100 = pneg %p94
      %p101 = scmp.eq.s32.totalorder %s17, 1
      %p102 = por %p100, %p101
      %p103 = scmp.ne.s32.totalorder %s95, %s98
      %p104 = scmp.eq.s32.totalorder %s17, 0
      %p105 = por %p103, %p104
      %p106 = scmp.ne.s32.totalorder %s95, %s98
      %p107 = scmp.eq.s32.totalorder %s22, 1
      %p108 = por %p106, %p107
      %p109 = scmp.ne.s32.totalorder %s98, %s99
      %p110 = scmp.eq.s32.totalorder %s22, 0
      %p111 = por %p109, %p110
      %p112 = scmp.ne.s32.totalorder %s98, %s99
      %p113 = scmp.eq.s32.totalorder %s23, 1
      %p114 = por %p112, %p113
      %p116 = scmp.ne.s32.totalorder %s99, %s115
      %p117 = scmp.eq.s32.totalorder %s23, 0
      %p118 = por %p116, %p117
      %s120 = sadd.s32 %s119, 1
      %p123 = scmp.eq.s32.totalorder %s17, 1
      %p124 = scmp.ne.s32.totalorder %s119, %s121
      %p125 = scmp.eq.s32.totalorder %s17, 0
      %p126 = por %p124, %p125
      %p127 = scmp.ne.s32.totalorder %s119, %s121
      %p128 = scmp.eq.s32.totalorder %s22, 1
      %p129 = por %p127, %p128
      %p130 = scmp.ne.s32.totalorder %s121, %s122
      %p131 = scmp.eq.s32.totalorder %s22, 0
      %p132 = por %p130, %p131
      %p133 = scmp.ne.s32.totalorder %s121, %s122
      %p134 = scmp.eq.s32.totalorder %s23, 1
      %p135 = por %p133, %p134
      %p137 = scmp.ne.s32.totalorder %s122, %s136
      %p138 = scmp.eq.s32.totalorder %s23, 0
      %p139 = por %p137, %p138
      %s141 = sadd.s32 %s140, 1
      %p144 = scmp.eq.s32.totalorder %s17, 1
      %p145 = scmp.ne.s32.totalorder %s140, %s142
      %p146 = scmp.eq.s32.totalorder %s17, 0
      %p147 = por %p145, %p146
      %p148 = scmp.ne.s32.totalorder %s140, %s142
      %p149 = scmp.eq.s32.totalorder %s22, 1
      %p150 = por %p148, %p149
      %p151 = scmp.ne.s32.totalorder %s142, %s143
      %p152 = scmp.eq.s32.totalorder %s22, 0
      %p153 = por %p151, %p152
      %p154 = scmp.ne.s32.totalorder %s142, %s143
      %p155 = scmp.eq.s32.totalorder %s23, 1
      %p156 = por %p154, %p155
      %p158 = scmp.ne.s32.totalorder %s143, %s157
      %p159 = scmp.eq.s32.totalorder %s23, 0
      %p160 = por %p158, %p159
      %s161 = ssub.s32 %s17, %s24
      %p162 = scmp.eq.s32.totalorder %s161, 0
      %s164 = sadd.s32 %s163, 1
      %s165 = scalar_select %p162, %s163, %s164
      %p168 = pneg %p162
      %p169 = scmp.eq.s32.totalorder %s17, 1
      %p170 = por %p168, %p169
      %p171 = scmp.ne.s32.totalorder %s163, %s166
      %p172 = scmp.eq.s32.totalorder %s17, 0
      %p173 = por %p171, %p172
      %p174 = scmp.ne.s32.totalorder %s163, %s166
      %p175 = scmp.eq.s32.totalorder %s22, 1
      %p176 = por %p174, %p175
      %p177 = scmp.ne.s32.totalorder %s166, %s167
      %p178 = scmp.eq.s32.totalorder %s22, 0
      %p179 = por %p177, %p178
      %p180 = scmp.ne.s32.totalorder %s166, %s167
      %p181 = scmp.eq.s32.totalorder %s23, 1
      %p182 = por %p180, %p181
      %p184 = scmp.ne.s32.totalorder %s167, %s183
      %p185 = scmp.eq.s32.totalorder %s23, 0
      %p186 = por %p184, %p185
      %p187 = scmp.le.s32.totalorder 1, %s17
      %p188 = scmp.lt.s32.totalorder %s17, 3
      %p189 = pnand %p187, %p188
      %p190 = pneg %p189
      // Predicated region
      $region9: #{tpu_custom_call.1} parent=5 // pred_check
        _
      $region10: #{tpu_custom_call.1} parent=5 // pred_check_branch
        %192 = sbr.rel (%p189) target = $region12
      $region11: #{tpu_custom_call.1} parent=5 // pred_region
        %s193 = ssub.s32 %s17, 1
        // Predicated region
        $region13: #{tpu_custom_call.1} parent=11 // pred_check
          %p194 = pneg %p64
        $region14: #{tpu_custom_call.1} parent=11 // pred_check_branch
          %196 = sbr.rel (%p194) target = $region16
        $region15: #{tpu_custom_call.1} parent=11 // pred_region
          %s198 = ssub.s32 256, 256
          %199 = vsyncadd [#allocation6], %s198
          %s200 = sshll.u32 [#allocation5], 4
          %s201 = int_to_ptr.vmem [resolvable:$true] %s200
          %206 = dma.hbm_to_vmem [thread:$0]  %s1, 256, %s201, [#allocation6], 128, 128, 8
        $region16: #{tpu_custom_call.1} parent=11 // pred_fallthru
          _
        // Predicated region
        $region17: #{tpu_custom_call.1} parent=11 // pred_check
          %p207 = pneg %p85
        $region18: #{tpu_custom_call.1} parent=11 // pred_check_branch
          %209 = sbr.rel (%p207) target = $region20
        $region19: #{tpu_custom_call.1} parent=11 // pred_region
          _
        $region20: #{tpu_custom_call.1} parent=11 // pred_fallthru
          _
        // Predicated region
        $region21: #{tpu_custom_call.1} parent=11 // pred_check
          %p210 = pneg %p132
        $region22: #{tpu_custom_call.1} parent=11 // pred_check_branch
          %212 = sbr.rel (%p210) target = $region24
        $region23: #{tpu_custom_call.1} parent=11 // pred_region
          %s214 = ssub.s32 384, 384
          %215 = vsyncadd [#allocation6], %s214
          %s216 = sshll.u32 [#allocation8], 4
          %s217 = int_to_ptr.vmem [resolvable:$true] %s216
          %222 = dma.hbm_to_vmem [thread:$0]  %s4, 384, %s217, [#allocation6], 128, 128, 8
        $region24: #{tpu_custom_call.1} parent=11 // pred_fallthru
          _
        // Predicated region
        $region25: #{tpu_custom_call.1} parent=11 // pred_check
          %p223 = pneg %p153
        $region26: #{tpu_custom_call.1} parent=11 // pred_check_branch
          %225 = sbr.rel (%p223) target = $region28
        $region27: #{tpu_custom_call.1} parent=11 // pred_region
          _
        $region28: #{tpu_custom_call.1} parent=11 // pred_fallthru
          _
      $region12: #{tpu_custom_call.1} parent=5 // pred_fallthru
        _
      %p226 = scmp.lt.s32.totalorder %s17, 2
      // Predicated region
      $region29: #{tpu_custom_call.1} parent=5 // pred_check
        %p227 = pneg %p226
      $region30: #{tpu_custom_call.1} parent=5 // pred_check_branch
        %229 = sbr.rel (%p227) target = $region32
      $region31: #{tpu_custom_call.1} parent=5 // pred_region
        // Predicated region
        $region33: #{tpu_custom_call.1} parent=31 // pred_check
          %p230 = pneg %p37
        $region34: #{tpu_custom_call.1} parent=31 // pred_check_branch
          %232 = sbr.rel (%p230) target = $region36
        $region35: #{tpu_custom_call.1} parent=31 // pred_region
          %s233 = sand.u32 %s17, 1
          %s234 = scalar_lea.sflag [#allocation4], %s233
          %s235 = sand.u32 %s27, 1
          %s236 = smul.addr %s235, 8
          %s237 = scalar_lea.vmem [#allocation3], %s236
          %s239 = ssub.s32 128, 128
          %240 = vsyncadd %s234, %s239
          %s241 = smul.addr %s17, 128
          %s242 = scalar_lea.hbm %s0, %s241
          %s244 = sshll.u32 %s237, 4
          %s245 = int_to_ptr.vmem [resolvable:$true] %s244
          %247 = dma.hbm_to_vmem [thread:$0]  %s242, 128, %s245, %s234
        $region36: #{tpu_custom_call.1} parent=31 // pred_fallthru
          _
        // Predicated region
        $region37: #{tpu_custom_call.1} parent=31 // pred_check
          %p248 = pneg %p105
        $region38: #{tpu_custom_call.1} parent=31 // pred_check_branch
          %250 = sbr.rel (%p248) target = $region40
        $region39: #{tpu_custom_call.1} parent=31 // pred_region
          %s251 = sand.u32 %s17, 1
          %s252 = scalar_lea.sflag [#allocation4], %s251
          %s253 = sand.u32 %s95, 1
          %s254 = smul.addr %s253, 8
          %s255 = scalar_lea.vmem [#allocation7], %s254
          %s257 = ssub.s32 128, 128
          %258 = vsyncadd %s252, %s257
          %s259 = smul.addr %s17, 128
          %s260 = scalar_lea.hbm %s3, %s259
          %s262 = sshll.u32 %s255, 4
          %s263 = int_to_ptr.vmem [resolvable:$true] %s262
          %265 = dma.hbm_to_vmem [thread:$0]  %s260, 128, %s263, %s252
        $region40: #{tpu_custom_call.1} parent=31 // pred_fallthru
          _
      $region32: #{tpu_custom_call.1} parent=5 // pred_fallthru
        _
      %p266 = scmp.le.s32.totalorder 1, %s17
      %p267 = scmp.lt.s32.totalorder %s17, 3
      %p268 = pnand %p266, %p267
      %p269 = pneg %p268
      // Predicated region
      $region41: #{tpu_custom_call.1} parent=5 // pred_check
        _
      $region42: #{tpu_custom_call.1} parent=5 // pred_check_branch
        %271 = sbr.rel (%p268) target = $region44
      $region43: #{tpu_custom_call.1} parent=5 // pred_region
        %s272 = ssub.s32 %s17, 1
        %s273 = sand.u32 %s22, 1
        %s274 = scalar_lea.sflag [#allocation4], %s273
        %s275 = sand.u32 %s30, 1
        %s276 = smul.addr %s275, 8
        %s277 = scalar_lea.vmem [#allocation3], %s276
        // Predicated region
        $region45: #{tpu_custom_call.1} parent=43 // pred_check
          %p278 = pneg %p43
        $region46: #{tpu_custom_call.1} parent=43 // pred_check_branch
          %280 = sbr.rel (%p278) target = $region48
        $region47: #{tpu_custom_call.1} parent=43 // pred_region
          %281 = dma.done %s274, 128
        $region48: #{tpu_custom_call.1} parent=43 // pred_fallthru
          _
        // Predicated region
        $region49: #{tpu_custom_call.1} parent=43 // pred_check
          %p282 = pneg %p64
        $region50: #{tpu_custom_call.1} parent=43 // pred_check_branch
          %284 = sbr.rel (%p282) target = $region52
        $region51: #{tpu_custom_call.1} parent=43 // pred_region
          %285 = dma.done [#allocation6], 256
        $region52: #{tpu_custom_call.1} parent=43 // pred_fallthru
          _
        %s286 = sand.u32 %s22, 1
        %s287 = scalar_lea.sflag [#allocation4], %s286
        %s288 = sand.u32 %s98, 1
        %s289 = smul.addr %s288, 8
        %s290 = scalar_lea.vmem [#allocation7], %s289
        // Predicated region
        $region53: #{tpu_custom_call.1} parent=43 // pred_check
          %p291 = pneg %p111
        $region54: #{tpu_custom_call.1} parent=43 // pred_check_branch
          %293 = sbr.rel (%p291) target = $region56
        $region55: #{tpu_custom_call.1} parent=43 // pred_region
          %294 = dma.done %s287, 128
        $region56: #{tpu_custom_call.1} parent=43 // pred_fallthru
          _
        // Predicated region
        $region57: #{tpu_custom_call.1} parent=43 // pred_check
          %p295 = pneg %p132
        $region58: #{tpu_custom_call.1} parent=43 // pred_check_branch
          %297 = sbr.rel (%p295) target = $region60
        $region59: #{tpu_custom_call.1} parent=43 // pred_region
          %298 = dma.done [#allocation6], 384
        $region60: #{tpu_custom_call.1} parent=43 // pred_fallthru
          _
        %s299 = sand.u32 %s22, 1
        %s300 = scalar_lea.sflag [#allocation4], %s299
        %s301 = sand.u32 %s30, 1
        %s302 = smul.addr %s301, 8
        %s303 = scalar_lea.vmem [#allocation3], %s302
        %p304 = pneg %p43
        %p305 = pneg %p40
        %p306 = pneg %p64
        %p307 = pneg %p61
        %p308 = pneg %p85
        %p309 = pneg %p82
        %s310 = sand.u32 %s22, 1
        %s311 = scalar_lea.sflag [#allocation4], %s310
        %s312 = sand.u32 %s98, 1
        %s313 = smul.addr %s312, 8
        %s314 = scalar_lea.vmem [#allocation7], %s313
        %p315 = pneg %p111
        %p316 = pneg %p108
        %p317 = pneg %p132
        %p318 = pneg %p129
        %p319 = pneg %p153
        %p320 = pneg %p150
        %p321 = pneg %p179
        %p322 = pneg %p176
        %s323 = smul.u32 16, %s22
        %p324 = scmp.lt.s32.totalorder %s323, 31
        %s325 = scalar_select %p324, %s323, 31
        %s326 = smul.addr %s325, 8
        %s327 = scalar_lea.vmem %s6, %s326
        %s328 = smul.u32 16, %s22
        %p329 = scmp.lt.s32.totalorder %s328, 31
        %s330 = scalar_select %p329, %s328, 31
        %s331 = smul.addr %s330, 8
        %s332 = scalar_lea.vmem %s6, %s331
        %s333 = smul.u32 16, %s22
        %v334 = vld [vmem:[%s277] sm:$0xff]
        %v335 = vld [vmem:[#allocation5] sm:$0xff]
        %v336 = vld [vmem:[#allocation5 + $0x8] sm:$0xff]
        %v337 = vld [vmem:[%s2] sm:$0x1]
        %v339 = vlaneseq
        %v340 = vshrl.u32 %v339, 7
        %v341 = vsub.s32 0, %v340
        %v342 = vrot.slane %v337, %v341
        %vm344 = vcmask 130048
        %v346 = vsel %vm344, %v334, 0
        %348 = vmatprep.subr.mxu0 0.0
        %349 = vmatpush1.msra.mxu0 %v335
        %350 = vmatprep.subr.mxu0 0.0
        %351 = vmatpush1.msra.mxu0 %v336
        %352 = vmatprep.subr.mxu0 0.0
        %353 = vmatpush1.msra.mxu0 0.0
        %354 = vmatprep.subr.mxu0 0.0
        %355 = vmatpush1.msra.mxu0 0.0
        %356 = vmatprep.subr.mxu0 0.0
        %357 = vmatpush1.msra.mxu0 0.0
        %358 = vmatprep.subr.mxu0 0.0
        %359 = vmatpush1.msra.mxu0 0.0
        %360 = vmatprep.subr.mxu0 0.0
        %361 = vmatpush1.msra.mxu0 0.0
        %362 = vmatprep.subr.mxu0 0.0
        %363 = vmatpush1.msra.mxu0 0.0
        %364 = vmatprep.subr.mxu0 0.0
        %365 = vmatpush1.msra.mxu0 0.0
        %366 = vmatprep.subr.mxu0 0.0
        %367 = vmatpush1.msra.mxu0 0.0
        %368 = vmatprep.subr.mxu0 0.0
        %369 = vmatpush1.msra.mxu0 0.0
        %370 = vmatprep.subr.mxu0 0.0
        %371 = vmatpush1.msra.mxu0 0.0
        %372 = vmatprep.subr.mxu0 0.0
        %373 = vmatpush1.msra.mxu0 0.0
        %374 = vmatprep.subr.mxu0 0.0
        %375 = vmatpush1.msra.mxu0 0.0
        %376 = vmatprep.subr.mxu0 0.0
        %377 = vmatpush1.msra.mxu0 0.0
        %378 = vmatprep.subr.mxu0 0.0
        %379 = vmatpush1.msra.mxu0 0.0
        %380 = vmatprep.subr.mxu0 0.0
        %381 = vmatpush1.msra.mxu0 0.0
        %382 = vmatprep.subr.mxu0 0.0
        %383 = vmatpush1.msra.mxu0 0.0
        %384 = vmatprep.subr.mxu0 0.0
        %385 = vmatpush1.msra.mxu0 0.0
        %386 = vmatprep.subr.mxu0 0.0
        %387 = vmatpush1.msra.mxu0 0.0
        %388 = vmatprep.subr.mxu0 0.0
        %389 = vmatpush1.msra.mxu0 0.0
        %390 = vmatprep.subr.mxu0 0.0
        %391 = vmatpush1.msra.mxu0 0.0
        %392 = vmatprep.subr.mxu0 0.0
        %393 = vmatpush1.msra.mxu0 0.0
        %394 = vmatprep.subr.mxu0 0.0
        %395 = vmatpush1.msra.mxu0 0.0
        %396 = vmatprep.subr.mxu0 0.0
        %397 = vmatpush1.msra.mxu0 0.0
        %398 = vmatprep.subr.mxu0 0.0
        %399 = vmatpush1.msra.mxu0 0.0
        %400 = vmatprep.subr.mxu0 0.0
        %401 = vmatpush1.msra.mxu0 0.0
        %402 = vmatprep.subr.mxu0 0.0
        %403 = vmatpush1.msra.mxu0 0.0
        %404 = vmatprep.subr.mxu0 0.0
        %405 = vmatpush1.msra.mxu0 0.0
        %406 = vmatprep.subr.mxu0 0.0
        %407 = vmatpush1.msra.mxu0 0.0
        %408 = vmatprep.subr.mxu0 0.0
        %409 = vmatpush1.msra.mxu0 0.0
        %410 = vmatprep.subr.mxu0 0.0
        %411 = vmatpush1.msra.mxu0 0.0
        %412 = vmatprep.mubr.f32.mxu0 0.0
        %413 = vmatmul.mubr.f32.gmra.mrb[0].mxu0 %v346
        %v414 = vpop.f32.mrb[0].mxu0
        %v415 = vadd.f32 %v342, %v414
        %v416 = vpop.f32.mrb[0].mxu0
        %417 = vdwg.mxu0
        %v418 = vmax.f32 %v415, 0.0
        %s419 = sld [smem:[#allocation2]]
        %v420 = vlaneseq
        %v421 = vshrl.u32 %v420, 7
        %v422 = vadd.s32 %v421, 8
        %v423 = vld [vmem:[%s290] sm:$0xff]
        %v424 = vcombine.high %v423, %v423
        %v426 = vunpack.c.l.s4 1966171168
        %v427 = vunpack.c.0.s8 %v426
        %v428 = vlaneseq
        %v429 = vshrl.u32 %v428, 7
        %v430 = vsub.s32 %v427, %v429
        %v431 = vrot.slane %v423, %v430
        %v433 = vunpack.c.l.s4 1966171168
        %v434 = vunpack.c.0.s8 %v433
        %v435 = vlaneseq
        %v436 = vshrl.u32 %v435, 7
        %v437 = vsub.s32 %v434, %v436
        %v438 = vrot.slane %v424, %v437
        %v439 = vcombine.high %v431, %v431
        %v440 = vcombine.high %v438, %v438
        %v442 = vunpack.c.l.s4 1966171168
        %v443 = vunpack.c.0.s8 %v442
        %v444 = vlaneseq
        %v445 = vshrl.u32 %v444, 7
        %v446 = vsub.s32 %v443, %v445
        %v447 = vrot.slane %v431, %v446
        %v449 = vunpack.c.l.s4 1966171168
        %v450 = vunpack.c.0.s8 %v449
        %v451 = vlaneseq
        %v452 = vshrl.u32 %v451, 7
        %v453 = vsub.s32 %v450, %v452
        %v454 = vrot.slane %v438, %v453
        %v456 = vunpack.c.l.s4 1966171168
        %v457 = vunpack.c.0.s8 %v456
        %v458 = vlaneseq
        %v459 = vshrl.u32 %v458, 7
        %v460 = vsub.s32 %v457, %v459
        %v461 = vrot.slane %v439, %v460
        %v463 = vunpack.c.l.s4 1966171168
        %v464 = vunpack.c.0.s8 %v463
        %v465 = vlaneseq
        %v466 = vshrl.u32 %v465, 7
        %v467 = vsub.s32 %v464, %v466
        %v468 = vrot.slane %v440, %v467
        %v469 = vcombine.high %v447, %v447
        %v470 = vcombine.high %v454, %v454
        %v471 = vcombine.high %v461, %v461
        %v472 = vcombine.high %v468, %v468
        %v473 = vlaneseq
        %v474 = vshrl.u32 %v473, 7
        %v475 = vsub.s32 0, %v474
        %v476 = vrot.slane %v447, %v475
        %v477 = vlaneseq
        %v478 = vshrl.u32 %v477, 7
        %v479 = vsub.s32 0, %v478
        %v480 = vrot.slane %v461, %v479
        %v481 = vlaneseq
        %v482 = vshrl.u32 %v481, 7
        %v483 = vsub.s32 0, %v482
        %v484 = vrot.slane %v469, %v483
        %v485 = vlaneseq
        %v486 = vshrl.u32 %v485, 7
        %v487 = vsub.s32 0, %v486
        %v488 = vrot.slane %v471, %v487
        %v489 = vlaneseq
        %v490 = vshrl.u32 %v489, 7
        %v491 = vsub.s32 0, %v490
        %v492 = vrot.slane %v454, %v491
        %v493 = vlaneseq
        %v494 = vshrl.u32 %v493, 7
        %v495 = vsub.s32 0, %v494
        %v496 = vrot.slane %v468, %v495
        %v497 = vlaneseq
        %v498 = vshrl.u32 %v497, 7
        %v499 = vsub.s32 0, %v498
        %v500 = vrot.slane %v470, %v499
        %v501 = vlaneseq
        %v502 = vshrl.u32 %v501, 7
        %v503 = vsub.s32 0, %v502
        %v504 = vrot.slane %v472, %v503
        %vm505 = vcmp.eq.s32.totalorder %v421, %v476
        %vm506 = vcmp.eq.s32.totalorder %v422, %v476
        %vm507 = vcmp.eq.s32.totalorder %v421, %v480
        %vm508 = vcmp.eq.s32.totalorder %v422, %v480
        %vm509 = vcmp.eq.s32.totalorder %v421, %v484
        %vm510 = vcmp.eq.s32.totalorder %v422, %v484
        %vm511 = vcmp.eq.s32.totalorder %v421, %v488
        %vm512 = vcmp.eq.s32.totalorder %v422, %v488
        %vm513 = vcmp.eq.s32.totalorder %v421, %v492
        %vm514 = vcmp.eq.s32.totalorder %v422, %v492
        %vm515 = vcmp.eq.s32.totalorder %v421, %v496
        %vm516 = vcmp.eq.s32.totalorder %v422, %v496
        %vm517 = vcmp.eq.s32.totalorder %v421, %v500
        %vm518 = vcmp.eq.s32.totalorder %v422, %v500
        %vm519 = vcmp.eq.s32.totalorder %v421, %v504
        %vm520 = vcmp.eq.s32.totalorder %v422, %v504
        %v522 = vcombine.high %v418, %v418
        %v524 = vunpack.c.l.s4 1966171168
        %v525 = vunpack.c.0.s8 %v524
        %v526 = vlaneseq
        %v527 = vshrl.u32 %v526, 7
        %v528 = vsub.s32 %v525, %v527
        %v529 = vrot.slane %v418, %v528
        %v531 = vunpack.c.l.s4 1966171168
        %v532 = vunpack.c.0.s8 %v531
        %v533 = vlaneseq
        %v534 = vshrl.u32 %v533, 7
        %v535 = vsub.s32 %v532, %v534
        %v536 = vrot.slane %v522, %v535
        %v537 = vcombine.high %v529, %v529
        %v538 = vcombine.high %v536, %v536
        %v540 = vunpack.c.l.s4 1966171168
        %v541 = vunpack.c.0.s8 %v540
        %v542 = vlaneseq
        %v543 = vshrl.u32 %v542, 7
        %v544 = vsub.s32 %v541, %v543
        %v545 = vrot.slane %v529, %v544
        %v547 = vunpack.c.l.s4 1966171168
        %v548 = vunpack.c.0.s8 %v547
        %v549 = vlaneseq
        %v550 = vshrl.u32 %v549, 7
        %v551 = vsub.s32 %v548, %v550
        %v552 = vrot.slane %v536, %v551
        %v554 = vunpack.c.l.s4 1966171168
        %v555 = vunpack.c.0.s8 %v554
        %v556 = vlaneseq
        %v557 = vshrl.u32 %v556, 7
        %v558 = vsub.s32 %v555, %v557
        %v559 = vrot.slane %v537, %v558
        %v561 = vunpack.c.l.s4 1966171168
        %v562 = vunpack.c.0.s8 %v561
        %v563 = vlaneseq
        %v564 = vshrl.u32 %v563, 7
        %v565 = vsub.s32 %v562, %v564
        %v566 = vrot.slane %v538, %v565
        %v567 = vcombine.high %v545, %v545
        %v568 = vcombine.high %v552, %v552
        %v569 = vcombine.high %v559, %v559
        %v570 = vcombine.high %v566, %v566
        %v571 = vlaneseq
        %v572 = vshrl.u32 %v571, 7
        %v573 = vsub.s32 0, %v572
        %v574 = vrot.slane %v545, %v573
        %v575 = vlaneseq
        %v576 = vshrl.u32 %v575, 7
        %v577 = vsub.s32 0, %v576
        %v578 = vrot.slane %v559, %v577
        %v579 = vlaneseq
        %v580 = vshrl.u32 %v579, 7
        %v581 = vsub.s32 0, %v580
        %v582 = vrot.slane %v567, %v581
        %v583 = vlaneseq
        %v584 = vshrl.u32 %v583, 7
        %v585 = vsub.s32 0, %v584
        %v586 = vrot.slane %v569, %v585
        %v587 = vlaneseq
        %v588 = vshrl.u32 %v587, 7
        %v589 = vsub.s32 0, %v588
        %v590 = vrot.slane %v552, %v589
        %v591 = vlaneseq
        %v592 = vshrl.u32 %v591, 7
        %v593 = vsub.s32 0, %v592
        %v594 = vrot.slane %v566, %v593
        %v595 = vlaneseq
        %v596 = vshrl.u32 %v595, 7
        %v597 = vsub.s32 0, %v596
        %v598 = vrot.slane %v568, %v597
        %v599 = vlaneseq
        %v600 = vshrl.u32 %v599, 7
        %v601 = vsub.s32 0, %v600
        %v602 = vrot.slane %v570, %v601
        %v611 = vsel %vm505, %v574, 0.0
        %v612 = vsel %vm506, %v574, 0.0
        %v613 = vsel %vm507, %v578, 0.0
        %v614 = vsel %vm508, %v578, 0.0
        %v615 = vsel %vm509, %v582, 0.0
        %v616 = vsel %vm510, %v582, 0.0
        %v617 = vsel %vm511, %v586, 0.0
        %v618 = vsel %vm512, %v586, 0.0
        %v619 = vsel %vm513, %v590, 0.0
        %v620 = vsel %vm514, %v590, 0.0
        %v621 = vsel %vm515, %v594, 0.0
        %v622 = vsel %vm516, %v594, 0.0
        %v623 = vsel %vm517, %v598, 0.0
        %v624 = vsel %vm518, %v598, 0.0
        %v625 = vsel %vm519, %v602, 0.0
        %v626 = vsel %vm520, %v602, 0.0
        %v627 = vld [vmem:[#allocation8] sm:$0xff]
        %v628 = vld [vmem:[#allocation8 + $0x8] sm:$0xff]
        %v629 = vld [vmem:[#allocation8 + $0x10] sm:$0xff]
        %v630 = vstv %s419
        %vm631 = vcmask 195584
        %v633 = vsel %vm631, %v611, 0
        %v636 = vsel %vm631, %v612, 0
        %v639 = vsel %vm631, %v613, 0
        %v642 = vsel %vm631, %v614, 0
        %v645 = vsel %vm631, %v615, 0
        %v648 = vsel %vm631, %v616, 0
        %v651 = vsel %vm631, %v617, 0
        %v654 = vsel %vm631, %v618, 0
        %v657 = vsel %vm631, %v619, 0
        %v660 = vsel %vm631, %v620, 0
        %v663 = vsel %vm631, %v621, 0
        %v666 = vsel %vm631, %v622, 0
        %v669 = vsel %vm631, %v623, 0
        %v672 = vsel %vm631, %v624, 0
        %v675 = vsel %vm631, %v625, 0
        %v678 = vsel %vm631, %v626, 0
        %680 = vmatprep.subr.mxu0 0.0
        %681 = vmatpush1.msra.mxu0 %v627
        %682 = vmatprep.subr.mxu0 0.0
        %683 = vmatpush1.msra.mxu0 %v628
        %684 = vmatprep.subr.mxu0 0.0
        %685 = vmatpush1.msra.mxu0 %v629
        %686 = vmatprep.subr.mxu0 0.0
        %687 = vmatpush1.msra.mxu0 0.0
        %688 = vmatprep.subr.mxu0 0.0
        %689 = vmatpush1.msra.mxu0 0.0
        %690 = vmatprep.subr.mxu0 0.0
        %691 = vmatpush1.msra.mxu0 0.0
        %692 = vmatprep.subr.mxu0 0.0
        %693 = vmatpush1.msra.mxu0 0.0
        %694 = vmatprep.subr.mxu0 0.0
        %695 = vmatpush1.msra.mxu0 0.0
        %696 = vmatprep.subr.mxu0 0.0
        %697 = vmatpush1.msra.mxu0 0.0
        %698 = vmatprep.subr.mxu0 0.0
        %699 = vmatpush1.msra.mxu0 0.0
        %700 = vmatprep.subr.mxu0 0.0
        %701 = vmatpush1.msra.mxu0 0.0
        %702 = vmatprep.subr.mxu0 0.0
        %703 = vmatpush1.msra.mxu0 0.0
        %704 = vmatprep.subr.mxu0 0.0
        %705 = vmatpush1.msra.mxu0 0.0
        %706 = vmatprep.subr.mxu0 0.0
        %707 = vmatpush1.msra.mxu0 0.0
        %708 = vmatprep.subr.mxu0 0.0
        %709 = vmatpush1.msra.mxu0 0.0
        %710 = vmatprep.subr.mxu0 0.0
        %711 = vmatpush1.msra.mxu0 0.0
        %712 = vmatprep.subr.mxu0 0.0
        %713 = vmatpush1.msra.mxu0 0.0
        %714 = vmatprep.subr.mxu0 0.0
        %715 = vmatpush1.msra.mxu0 0.0
        %716 = vmatprep.subr.mxu0 0.0
        %717 = vmatpush1.msra.mxu0 0.0
        %718 = vmatprep.subr.mxu0 0.0
        %719 = vmatpush1.msra.mxu0 0.0
        %720 = vmatprep.subr.mxu0 0.0
        %721 = vmatpush1.msra.mxu0 0.0
        %722 = vmatprep.subr.mxu0 0.0
        %723 = vmatpush1.msra.mxu0 0.0
        %724 = vmatprep.subr.mxu0 0.0
        %725 = vmatpush1.msra.mxu0 0.0
        %726 = vmatprep.subr.mxu0 0.0
        %727 = vmatpush1.msra.mxu0 0.0
        %728 = vmatprep.subr.mxu0 0.0
        %729 = vmatpush1.msra.mxu0 0.0
        %730 = vmatprep.subr.mxu0 0.0
        %731 = vmatpush1.msra.mxu0 0.0
        %732 = vmatprep.subr.mxu0 0.0
        %733 = vmatpush1.msra.mxu0 0.0
        %734 = vmatprep.subr.mxu0 0.0
        %735 = vmatpush1.msra.mxu0 0.0
        %736 = vmatprep.subr.mxu0 0.0
        %737 = vmatpush1.msra.mxu0 0.0
        %738 = vmatprep.subr.mxu0 0.0
        %739 = vmatpush1.msra.mxu0 0.0
        %740 = vmatprep.subr.mxu0 0.0
        %741 = vmatpush1.msra.mxu0 0.0
        %742 = vmatprep.subr.mxu0 0.0
        %743 = vmatpush1.msra.mxu0 0.0
        %744 = vmatprep.mubr.f32.mxu0 0.0
        %745 = vmatmul.mubr.f32.gmra.mrb[0].mxu0 %v633
        %v746 = vpop.f32.mrb[0].mxu0
        %v747 = vadd.f32 %v630, %v746
        %v748 = vpop.f32.mrb[0].mxu0
        %749 = vmatprep.mubr.f32.mxu0 0.0
        %750 = vmatmul.mubr.f32.gmra.mrb[0].mxu0 %v636
        %v751 = vpop.f32.mrb[0].mxu0
        %v752 = vadd.f32 %v630, %v751
        %v753 = vpop.f32.mrb[0].mxu0
        %754 = vmatprep.mubr.f32.mxu0 0.0
        %755 = vmatmul.mubr.f32.gmra.mrb[0].mxu0 %v639
        %v756 = vpop.f32.mrb[0].mxu0
        %v757 = vadd.f32 %v630, %v756
        %v758 = vpop.f32.mrb[0].mxu0
        %759 = vmatprep.mubr.f32.mxu0 0.0
        %760 = vmatmul.mubr.f32.gmra.mrb[0].mxu0 %v642
        %v761 = vpop.f32.mrb[0].mxu0
        %v762 = vadd.f32 %v630, %v761
        %v763 = vpop.f32.mrb[0].mxu0
        %764 = vmatprep.mubr.f32.mxu0 0.0
        %765 = vmatmul.mubr.f32.gmra.mrb[0].mxu0 %v645
        %v766 = vpop.f32.mrb[0].mxu0
        %v767 = vadd.f32 %v630, %v766
        %v768 = vpop.f32.mrb[0].mxu0
        %769 = vmatprep.mubr.f32.mxu0 0.0
        %770 = vmatmul.mubr.f32.gmra.mrb[0].mxu0 %v648
        %v771 = vpop.f32.mrb[0].mxu0
        %v772 = vadd.f32 %v630, %v771
        %v773 = vpop.f32.mrb[0].mxu0
        %774 = vmatprep.mubr.f32.mxu0 0.0
        %775 = vmatmul.mubr.f32.gmra.mrb[0].mxu0 %v651
        %v776 = vpop.f32.mrb[0].mxu0
        %v777 = vadd.f32 %v630, %v776
        %v778 = vpop.f32.mrb[0].mxu0
        %779 = vmatprep.mubr.f32.mxu0 0.0
        %780 = vmatmul.mubr.f32.gmra.mrb[0].mxu0 %v654
        %v781 = vpop.f32.mrb[0].mxu0
        %v782 = vadd.f32 %v630, %v781
        %v783 = vpop.f32.mrb[0].mxu0
        %784 = vmatprep.mubr.f32.mxu0 0.0
        %785 = vmatmul.mubr.f32.gmra.mrb[0].mxu0 %v657
        %v786 = vpop.f32.mrb[0].mxu0
        %v787 = vadd.f32 %v630, %v786
        %v788 = vpop.f32.mrb[0].mxu0
        %789 = vmatprep.mubr.f32.mxu0 0.0
        %790 = vmatmul.mubr.f32.gmra.mrb[0].mxu0 %v660
        %v791 = vpop.f32.mrb[0].mxu0
        %v792 = vadd.f32 %v630, %v791
        %v793 = vpop.f32.mrb[0].mxu0
        %794 = vmatprep.mubr.f32.mxu0 0.0
        %795 = vmatmul.mubr.f32.gmra.mrb[0].mxu0 %v663
        %v796 = vpop.f32.mrb[0].mxu0
        %v797 = vadd.f32 %v630, %v796
        %v798 = vpop.f32.mrb[0].mxu0
        %799 = vmatprep.mubr.f32.mxu0 0.0
        %800 = vmatmul.mubr.f32.gmra.mrb[0].mxu0 %v666
        %v801 = vpop.f32.mrb[0].mxu0
        %v802 = vadd.f32 %v630, %v801
        %v803 = vpop.f32.mrb[0].mxu0
        %804 = vmatprep.mubr.f32.mxu0 0.0
        %805 = vmatmul.mubr.f32.gmra.mrb[0].mxu0 %v669
        %v806 = vpop.f32.mrb[0].mxu0
        %v807 = vadd.f32 %v630, %v806
        %v808 = vpop.f32.mrb[0].mxu0
        %809 = vmatprep.mubr.f32.mxu0 0.0
        %810 = vmatmul.mubr.f32.gmra.mrb[0].mxu0 %v672
        %v811 = vpop.f32.mrb[0].mxu0
        %v812 = vadd.f32 %v630, %v811
        %v813 = vpop.f32.mrb[0].mxu0
        %814 = vmatprep.mubr.f32.mxu0 0.0
        %815 = vmatmul.mubr.f32.gmra.mrb[0].mxu0 %v675
        %v816 = vpop.f32.mrb[0].mxu0
        %v817 = vadd.f32 %v630, %v816
        %v818 = vpop.f32.mrb[0].mxu0
        %819 = vmatprep.mubr.f32.mxu0 0.0
        %820 = vmatmul.mubr.f32.gmra.mrb[0].mxu0 %v678
        %v821 = vpop.f32.mrb[0].mxu0
        %v822 = vadd.f32 %v630, %v821
        %v823 = vpop.f32.mrb[0].mxu0
        %824 = vdwg.mxu0
        %vm825 = vcmask 261120
        %826 = vst.msk [vmem:[%s332] sm:$0xff] %vm825, %v747
        %827 = vst.msk [vmem:[%s332 + $0x8] sm:$0xff] %vm825, %v752
        %828 = vst.msk [vmem:[%s332 + $0x10] sm:$0xff] %vm825, %v757
        %829 = vst.msk [vmem:[%s332 + $0x18] sm:$0xff] %vm825, %v762
        %830 = vst.msk [vmem:[%s332 + $0x20] sm:$0xff] %vm825, %v767
        %831 = vst.msk [vmem:[%s332 + $0x28] sm:$0xff] %vm825, %v772
        %832 = vst.msk [vmem:[%s332 + $0x30] sm:$0xff] %vm825, %v777
        %833 = vst.msk [vmem:[%s332 + $0x38] sm:$0xff] %vm825, %v782
        %834 = vst.msk [vmem:[%s332 + $0x40] sm:$0xff] %vm825, %v787
        %835 = vst.msk [vmem:[%s332 + $0x48] sm:$0xff] %vm825, %v792
        %836 = vst.msk [vmem:[%s332 + $0x50] sm:$0xff] %vm825, %v797
        %837 = vst.msk [vmem:[%s332 + $0x58] sm:$0xff] %vm825, %v802
        %838 = vst.msk [vmem:[%s332 + $0x60] sm:$0xff] %vm825, %v807
        %839 = vst.msk [vmem:[%s332 + $0x68] sm:$0xff] %vm825, %v812
        %840 = vst.msk [vmem:[%s332 + $0x70] sm:$0xff] %vm825, %v817
        %841 = vst.msk [vmem:[%s332 + $0x78] sm:$0xff] %vm825, %v822
        %s842 = smul.u32 16, %s22
        %p843 = scmp.lt.s32.totalorder %s842, 31
        %s844 = scalar_select %p843, %s842, 31
        %s845 = smul.addr %s844, 8
        %s846 = scalar_lea.vmem %s6, %s845
        // Predicated region
        $region61: #{tpu_custom_call.1} parent=43 // pred_check
          %p847 = pneg %p176
        $region62: #{tpu_custom_call.1} parent=43 // pred_check_branch
          %849 = sbr.rel (%p847) target = $region64
        $region63: #{tpu_custom_call.1} parent=43 // pred_region
          %s850 = smul.u32 16, %s22
        $region64: #{tpu_custom_call.1} parent=43 // pred_fallthru
          _
      $region44: #{tpu_custom_call.1} parent=5 // pred_fallthru
        _
      %p851 = scmp.le.s32.totalorder 2, %s17
      // Predicated region
      $region65: #{tpu_custom_call.1} parent=5 // pred_check
        %p852 = pneg %p851
      $region66: #{tpu_custom_call.1} parent=5 // pred_check_branch
        %854 = sbr.rel (%p852) target = $region68
      $region67: #{tpu_custom_call.1} parent=5 // pred_region
        %s855 = ssub.s32 %s17, 2
        // Predicated region
        $region69: #{tpu_custom_call.1} parent=67 // pred_check
          %p856 = pneg %p182
        $region70: #{tpu_custom_call.1} parent=67 // pred_check_branch
          %858 = sbr.rel (%p856) target = $region72
        $region71: #{tpu_custom_call.1} parent=67 // pred_region
          %s859 = smul.u32 16, %s23
          %p860 = scmp.lt.s32.totalorder %s859, 31
          %s861 = scalar_select %p860, %s859, 31
          %s862 = smul.addr %s861, 8
          %s863 = scalar_lea.vmem %s6, %s862
        $region72: #{tpu_custom_call.1} parent=67 // pred_fallthru
          _
      $region68: #{tpu_custom_call.1} parent=5 // pred_fallthru
        _
    $region6: #{tpu_custom_call.1} parent=1 // loop_footer
      %s21 = sadd.s32 1, %s17
    $region7: #{tpu_custom_call.1} parent=1 // loop_footer_branch
      %16 = sbr.rel target = $region3
    $region8: #{tpu_custom_call.1} parent=1 // loop_exit
      _
    %864 = vsyncpa [#allocation4], 1
    %s865 = scalar_lea.sflag [#allocation4], 1
    %866 = vsyncpa %s865, 1
    %867 = vsyncpa [#allocation6], 1

</llo_original>
